<compile_context>
chip_gen: v7x
topology: tpu7x:2x2x1
jax: 0.10.0
libtpu: 0.0.40
codegen_flags: <defaults>
</compile_context>

<pallas_src>
import jax
import jax.numpy as jnp
from jax.experimental import pallas as pl
from jax.experimental.pallas import tpu as pltpu

RESNET_OUTPUT_SIZE = 2048   # size == 256 branch of the module
HIDDEN = 100
HIDDEN_PAD = 128            # hidden padded to one full lane tile
OUT = 1


def _round_up(n, m):
    return (n + m - 1) // m * m


def _tpu_generation():
    """Best-effort TPU generation (5 / 6 / 7 ...); falls back to 6."""
    try:
        kind = jax.devices()[0].device_kind.lower()
    except Exception:
        return 6
    digits = "".join(c if c.isdigit() else " " for c in kind).split()
    return int(digits[0]) if digits else 6


def prepare_params(w1, b1, w2, b2):
    """One-time weight repack (hoisted out of the per-call path).

    w1: (2048, 100)  b1: (100,)     -- note: (in, out) layout, i.e. the
    w2: (100, 1)     b2: (1,)          transpose of PyTorch nn.Linear.weight.
    """
    F, H, HP = RESNET_OUTPUT_SIZE, HIDDEN, HIDDEN_PAD
    w1_p = jnp.zeros((F, HP), jnp.bfloat16).at[:, :H].set(w1.astype(jnp.bfloat16))
    b1_p = jnp.zeros((1, HP), jnp.float32).at[:, :H].set(b1.astype(jnp.float32))
    w2_row = jnp.zeros((1, HP), jnp.float32).at[:, :H].set(
        jnp.reshape(w2, (1, H)).astype(jnp.float32))
    b2_2d = jnp.reshape(b2, (1, OUT)).astype(jnp.float32)
    return w1_p, b1_p, w2_row, b2_2d


def _mlp_kernel(x_ref, w1_ref, b1_ref, w2_ref, b2_ref, o_ref):
    # x_ref : (TB, 2048) f32/bf16    w1_ref: (2048, 128) bf16
    # b1_ref: (1, 128)   f32         w2_ref: (1, 128)    f32 (fc2 weight row)
    # b2_ref: (1, 1)     f32         o_ref : (TB, 1)     f32
    x = x_ref[...].astype(jnp.bfloat16)          # VPU cast, hidden under DMA
    # fc1 on the MXU, f32 accumulation.
    h = jnp.dot(x, w1_ref[...], preferred_element_type=jnp.float32)
    h = jnp.maximum(h + b1_ref[...], 0.0)        # F.relu(fc1(x))
    # fc2: (TB,128)@(128,1) would waste the MXU -> VPU multiply + lane reduce.
    y = jnp.sum(h * w2_ref[...], axis=-1, keepdims=True) + b2_ref[...]
    o_ref[...] = y.astype(o_ref.dtype)


def resnet_detector1_forward(x, params, *, max_batch_tile=None):
    """Pallas implementation of ResnetDetector1.forward.

    x      : any array whose trailing elements flatten to (-1, 2048)
    params : output of prepare_params(w1, b1, w2, b2)
    returns: (B,) float32
    """
    F, HP = RESNET_OUTPUT_SIZE, HIDDEN_PAD
    w1_p, b1_p, w2_row, b2_2d = params

    x2d = jnp.reshape(x, (-1, F))                       # x.view(-1, 2048)
    if x2d.dtype not in (jnp.float32, jnp.bfloat16):
        x2d = x2d.astype(jnp.float32)
    B = x2d.shape[0]
    itemsize = x2d.dtype.itemsize

    gen = _tpu_generation()
    if gen >= 7:            # v7x: 64 MiB VMEM/TC is the binding constraint
        x_buf_budget, vmem_limit = 32 << 20, 50 << 20
    elif gen == 6:          # v6e: 128 MiB physical, 32 MiB default scoped
        x_buf_budget, vmem_limit = 32 << 20, 64 << 20
    else:                   # v5e and older: keep the double buffer modest
        x_buf_budget, vmem_limit = 16 << 20, 32 << 20

    # Batch tile from the x double-buffer budget:
    #   f32 -> 2048 rows (v6e/v7x) / 1024 (v5e); bf16 -> twice that.
    TB = x_buf_budget // (2 * F * itemsize)
    if max_batch_tile is not None:
        TB = min(TB, max_batch_tile)
    # v7x megacore: keep >= 2 "parallel" grid steps so both TensorCores work.
    if gen >= 7 and B > 8:
        TB = min(TB, _round_up(-(-B // 2), 8))
    TB = max(8, (TB // 8) * 8)      # sublane multiple
    TB = min(TB, B)                 # == B (full extent) is always a legal block

    num_tiles = -(-B // TB)         # partial last tile handled by Pallas masking

    cost = pl.CostEstimate(
        flops=2 * B * F * HP + 3 * B * HP,
        transcendentals=0,
        bytes_accessed=(B * F * itemsize        # x (producer dtype)
                        + F * HP * 2            # w1 (bf16, resident)
                        + 2 * HP * 4 + 4        # b1, w2 row, b2
                        + B * OUT * 4),         # output
    )

    out = pl.pallas_call(
        _mlp_kernel,
        out_shape=jax.ShapeDtypeStruct((B, OUT), jnp.float32),
        grid=(num_tiles,),
        in_specs=[
            pl.BlockSpec((TB, F), lambda i: (i, 0)),     # x: streamed / pipelined
            # Resident operands (constant index_maps -> fetched once, reused).
            pl.BlockSpec((F, HP), lambda i: (0, 0)),     # fc1 weight (~0.5 MiB)
            pl.BlockSpec((1, HP), lambda i: (0, 0)),     # fc1 bias
            pl.BlockSpec((1, HP), lambda i: (0, 0)),     # fc2 weight row
            pl.BlockSpec((1, OUT), lambda i: (0, 0)),    # fc2 bias
        ],
        out_specs=pl.BlockSpec((TB, OUT), lambda i: (i, 0)),
        compiler_params=pltpu.CompilerParams(
            dimension_semantics=("parallel",),           # megacore split on v7x
            vmem_limit_bytes=vmem_limit,
        ),
        cost_estimate=cost,
    )(x2d, w1_p, b1_p, w2_row, b2_2d)

    return out[:, 0]                                     # .squeeze(1)


def init_params(key):
    """Deterministic init mimicking nn.Linear default (U[-1/sqrt(fan_in), +])."""
    k1, k2, k3, k4 = jax.random.split(key, 4)
    bound1 = 1.0 / jnp.sqrt(float(RESNET_OUTPUT_SIZE))
    bound2 = 1.0 / jnp.sqrt(float(HIDDEN))
    w1 = jax.random.uniform(k1, (RESNET_OUTPUT_SIZE, HIDDEN), jnp.float32,
                            -bound1, bound1)
    b1 = jax.random.uniform(k2, (HIDDEN,), jnp.float32, -bound1, bound1)
    w2 = jax.random.uniform(k3, (HIDDEN, OUT), jnp.float32, -bound2, bound2)
    b2 = jax.random.uniform(k4, (OUT,), jnp.float32, -bound2, bound2)
    return w1, b1, w2, b2


def _reference(x, w1, b1, w2, b2, cast_bf16=False):
    if cast_bf16:
        x = x.astype(jnp.bfloat16).astype(jnp.float32)
        w1 = w1.astype(jnp.bfloat16).astype(jnp.float32)
    h = jnp.maximum(x @ w1 + b1, 0.0)
    return (h @ w2)[:, 0] + b2[0]


if __name__ == "__main__":
    key = jax.random.PRNGKey(0)
    k_x, k_p, k_x2 = jax.random.split(key, 3)

    w1, b1, w2, b2 = init_params(k_p)
    params = prepare_params(w1, b1, w2, b2)          # one-time weight repack

    # --- small single-tile check: B=2 (full-extent batch block) ---
    B = 2
    x = jax.random.normal(k_x, (B, RESNET_OUTPUT_SIZE), jnp.float32)
    y = jax.block_until_ready(resnet_detector1_forward(x, params))
    ref_f32 = _reference(x, w1, b1, w2, b2)
    ref_bf16 = _reference(x, w1, b1, w2, b2, cast_bf16=True)
    assert y.shape == (B,)
    assert jnp.allclose(y, ref_bf16, atol=1e-2, rtol=1e-2), (y, ref_bf16)
    assert jnp.allclose(y, ref_f32, atol=5e-2, rtol=5e-2), (y, ref_f32)

    # --- multi-tile path with a masked partial last tile: B=20, TB=16 ---
    B2 = 20
    x2 = jax.random.normal(k_x2, (B2, RESNET_OUTPUT_SIZE), jnp.float32)
    y2 = jax.block_until_ready(
        resnet_detector1_forward(x2, params, max_batch_tile=16))
    ref2 = _reference(x2, w1, b1, w2, b2)
    assert y2.shape == (B2,)
    assert jnp.allclose(y2, ref2, atol=5e-2, rtol=5e-2), (y2, ref2)

    # --- bf16 producer dtype (no in-kernel precision change needed) ---
    y3 = jax.block_until_ready(
        resnet_detector1_forward(x2.astype(jnp.bfloat16), params))
    assert y3.shape == (B2,)
    assert jnp.allclose(y3, ref2, atol=5e-2, rtol=5e-2), (y3, ref2)

    print("KERNEL_OK")
</pallas_src>

<mosaic_0001>
module attributes {stable_mosaic.version = 11 : i64} {
  func.func @_mlp_kernel(%arg0: i32, %arg1: memref<2x2048xf32, #tpu.memory_space<vmem>>, %arg2: memref<2048x128xbf16, #tpu.memory_space<vmem>>, %arg3: memref<1x128xf32, #tpu.memory_space<vmem>>, %arg4: memref<1x128xf32, #tpu.memory_space<vmem>>, %arg5: memref<1x1xf32, #tpu.memory_space<vmem>>, %arg6: memref<2x1xf32, #tpu.memory_space<vmem>>) attributes {dimension_semantics = [#tpu.dimension_semantics<parallel>], iteration_bounds = array<i64: 1>, scalar_prefetch = 0 : i64, scratch_operands = 0 : i64, tpu.core_type = #tpu.core_type<tc>, window_params = [{transform_indices = @transform_0, window_bounds = array<i64: 2, 2048>}, {pipeline_mode = #tpu.pipeline_mode<synchronous>, transform_indices = @transform_1, window_bounds = array<i64: 2048, 128>}, {pipeline_mode = #tpu.pipeline_mode<synchronous>, transform_indices = @transform_2, window_bounds = array<i64: 1, 128>}, {pipeline_mode = #tpu.pipeline_mode<synchronous>, transform_indices = @transform_3, window_bounds = array<i64: 1, 128>}, {pipeline_mode = #tpu.pipeline_mode<synchronous>, transform_indices = @transform_4, window_bounds = array<i64: 1, 1>}, {transform_indices = @transform_5, window_bounds = array<i64: 2, 1>}]} {
    %c0 = arith.constant 0 : index
    %c0_0 = arith.constant 0 : index
    %0 = vector.load %arg1[%c0, %c0_0] : memref<2x2048xf32, #tpu.memory_space<vmem>>, vector<2x2048xf32>
    %1 = arith.truncf %0 : vector<2x2048xf32> to vector<2x2048xbf16>
    %c0_1 = arith.constant 0 : index
    %c0_2 = arith.constant 0 : index
    %2 = vector.load %arg2[%c0_1, %c0_2] : memref<2048x128xbf16, #tpu.memory_space<vmem>>, vector<2048x128xbf16>
    %cst = arith.constant dense<0.000000e+00> : vector<2x128xf32>
    %3 = tpu.matmul %1, %2, %cst {dimension_numbers = #tpu.dot_dimension_numbers<[1], [0], [0], [1], [0, 0, 1, 1], [], []>} : vector<2x2048xbf16>, vector<2048x128xbf16>, vector<2x128xf32> -> vector<2x128xf32>
    %c0_3 = arith.constant 0 : index
    %c0_4 = arith.constant 0 : index
    %4 = vector.load %arg3[%c0_3, %c0_4] : memref<1x128xf32, #tpu.memory_space<vmem>>, vector<1x128xf32>
    %5 = vector.broadcast %4 : vector<1x128xf32> to vector<2x128xf32>
    %6 = arith.addf %3, %5 : vector<2x128xf32>
    %cst_5 = arith.constant 0.000000e+00 : f32
    %7 = vector.broadcast %cst_5 : f32 to vector<2x128xf32>
    %8 = arith.maximumf %6, %7 : vector<2x128xf32>
    %c0_6 = arith.constant 0 : index
    %c0_7 = arith.constant 0 : index
    %9 = vector.load %arg4[%c0_6, %c0_7] : memref<1x128xf32, #tpu.memory_space<vmem>>, vector<1x128xf32>
    %10 = vector.broadcast %9 : vector<1x128xf32> to vector<2x128xf32>
    %11 = arith.mulf %8, %10 : vector<2x128xf32>
    %cst_8 = arith.constant dense<0.000000e+00> : vector<2xf32>
    %12 = vector.multi_reduction <add>, %11, %cst_8 [1] : vector<2x128xf32> to vector<2xf32>
    %13 = vector.shape_cast %12 : vector<2xf32> to vector<2x1xf32>
    %c0_9 = arith.constant 0 : index
    %c0_10 = arith.constant 0 : index
    %14 = vector.load %arg5[%c0_9, %c0_10] : memref<1x1xf32, #tpu.memory_space<vmem>>, vector<1x1xf32>
    %15 = vector.broadcast %14 : vector<1x1xf32> to vector<2x1xf32>
    %16 = arith.addf %13, %15 : vector<2x1xf32>
    %c0_11 = arith.constant 0 : index
    %c0_12 = arith.constant 0 : index
    %17 = vector.load %arg6[%c0_11, %c0_12] : memref<2x1xf32, #tpu.memory_space<vmem>>, vector<2x1xf32>
    tpu.vector_store %arg6[%c0_11, %c0_12], %16 {strides = array<i32>} : memref<2x1xf32, #tpu.memory_space<vmem>>, vector<2x1xf32>,
    return
  }
  func.func @transform_0(%arg0: i32) -> (i32, i32) {
    %c0_i32 = arith.constant 0 : i32
    %c0_i32_0 = arith.constant 0 : i32
    return %arg0, %c0_i32 : i32, i32
  }
  func.func @transform_1(%arg0: i32) -> (i32, i32) {
    %c0_i32 = arith.constant 0 : i32
    %c0_i32_0 = arith.constant 0 : i32
    %c0_i32_1 = arith.constant 0 : i32
    return %c0_i32, %c0_i32_0 : i32, i32
  }
  func.func @transform_2(%arg0: i32) -> (i32, i32) {
    %c0_i32 = arith.constant 0 : i32
    %c0_i32_0 = arith.constant 0 : i32
    %c0_i32_1 = arith.constant 0 : i32
    return %c0_i32, %c0_i32_0 : i32, i32
  }
  func.func @transform_3(%arg0: i32) -> (i32, i32) {
    %c0_i32 = arith.constant 0 : i32
    %c0_i32_0 = arith.constant 0 : i32
    %c0_i32_1 = arith.constant 0 : i32
    return %c0_i32, %c0_i32_0 : i32, i32
  }
  func.func @transform_4(%arg0: i32) -> (i32, i32) {
    %c0_i32 = arith.constant 0 : i32
    %c0_i32_0 = arith.constant 0 : i32
    %c0_i32_1 = arith.constant 0 : i32
    return %c0_i32, %c0_i32_0 : i32, i32
  }
  func.func @transform_5(%arg0: i32) -> (i32, i32) {
    %c0_i32 = arith.constant 0 : i32
    %c0_i32_0 = arith.constant 0 : i32
    return %arg0, %c0_i32 : i32, i32
  }
}

</mosaic_0001>

<llo_original>
// kernel: tpu_custom_call.1
$region0: #{tpu_custom_call.1}
  #allocation0 [shape = 'u32[]', space=smem, size = 0x4, offset = 0x4, fixed_abs, tag = 'smem constant byte address 0x4 - core index']
  #allocation1 [shape = 'u32[144,128]{1,0:T(1,128)}', space=vmem, size = 0x12000, scoped, tag = 'internal scratch']
  #allocation2 [shape = 'f32[1,1]{1,0:T(1,128)S(1)}', space=vmem, size = 0x200, scoped, tag = 'scoped memory for tpu_custom_call.1']
  %s0 = inlined_call_operand.hbm [shape: f32[2,2048], index: 0, kind: input, shape index: {}]
  %s1 = inlined_call_operand.hbm [shape: bf16[2048,128], index: 1, kind: input, shape index: {}]
  %s2 = inlined_call_operand.hbm [shape: f32[1,128], index: 2, kind: input, shape index: {}]
  %s3 = inlined_call_operand.hbm [shape: f32[1,128], index: 3, kind: input, shape index: {}]
  %s4 = inlined_call_operand.<no memory space> [shape: f32[1,1], index: 4, kind: input, shape index: {}]
  %s5 = inlined_call_operand.hbm [shape: f32[2,1], index: 5, kind: output, shape index: {}]
  %s6 = sld [smem:[#allocation0]]
  $region46: #{tpu_custom_call.1} parent=0
    _
  %s8 = ssub.s32 1, %s6
  %s9 = scalar_select 0, %s8, %s6
  %v10 = vstv %s4
  %11 = vst [vmem:[#allocation2] sm:$0x1] %v10
  $region1: #{tpu_custom_call.1} parent=0
    #allocation3 [shape = 'u8[16384]{0}', space=vmem, size = 0x4000, scoped, tag = 'input window, operand 0, single buffered']
    #allocation4 [shape = 's32[1]{0}', space=sflag, size = 0x4, scoped, tag = 'scoped memory for tpu_custom_call.1']
    #allocation5 [shape = 's32[1]{0}', space=sflag, size = 0x4, scoped, tag = 'scoped memory for tpu_custom_call.1']
    #allocation6 [shape = 'u8[524288]{0}', space=vmem, size = 0x80000, scoped, tag = 'input window, operand 1, single buffered']
    #allocation7 [shape = 's32[1]{0}', space=sflag, size = 0x4, scoped, tag = 'scoped memory for tpu_custom_call.1']
    #allocation8 [shape = 'u8[512]{0}', space=vmem, size = 0x400, scoped, tag = 'input window, operand 2, single buffered']
    #allocation9 [shape = 'u8[512]{0}', space=vmem, size = 0x400, scoped, tag = 'input window, operand 3, single buffered']
    #allocation10 [shape = 's32[1]{0}', space=sflag, size = 0x4, scoped, tag = 'scoped memory for tpu_custom_call.1']
    #allocation11 [shape = 'u8[1024]{0}', space=vmem, size = 0x400, scoped, tag = 'output window, operand 0, single buffered']
    %12 = vsyncpa [#allocation4], 0
    %13 = vsyncpa [#allocation7], 0
    %14 = vsyncpa [#allocation10], 0
    %15 = vsyncpa [#allocation5], 0
    // Predicated region
    $region2: #{tpu_custom_call.1} parent=1 // pred_check
      _
    $region3: #{tpu_custom_call.1} parent=1 // pred_check_branch
      %17 = sbr.rel (0) target = $region5
    $region4: #{tpu_custom_call.1} parent=1 // pred_region
      %s19 = ssub.s32 512, 512
      %20 = vsyncadd [#allocation4], %s19
      %s22 = sshll.u32 [#allocation3], 4
      %s23 = int_to_ptr.vmem [resolvable:$true] %s22
      %25 = dma.hbm_to_vmem [thread:$0]  %s0, 512, %s23, [#allocation4]
    $region5: #{tpu_custom_call.1} parent=1 // pred_fallthru
      _
    // Predicated region
    $region6: #{tpu_custom_call.1} parent=1 // pred_check
      _
    $region7: #{tpu_custom_call.1} parent=1 // pred_check_branch
      %27 = sbr.rel (0) target = $region9
    $region8: #{tpu_custom_call.1} parent=1 // pred_region
      %s29 = ssub.s32 16384, 16384
      %30 = vsyncadd [#allocation7], %s29
      %s31 = sshll.u32 [#allocation6], 4
      %s32 = int_to_ptr.vmem [resolvable:$true] %s31
      %37 = dma.hbm_to_vmem [thread:$0]  %s1, 16384, %s32, [#allocation7], 64, 64, 4
    $region9: #{tpu_custom_call.1} parent=1 // pred_fallthru
      _
    // Predicated region
    $region10: #{tpu_custom_call.1} parent=1 // pred_check
      _
    $region11: #{tpu_custom_call.1} parent=1 // pred_check_branch
      %39 = sbr.rel (0) target = $region13
    $region12: #{tpu_custom_call.1} parent=1 // pred_region
      %s41 = ssub.s32 16, 16
      %42 = vsyncadd [#allocation7], %s41
      %s44 = sshll.u32 [#allocation8], 4
      %s45 = int_to_ptr.vmem [resolvable:$true] %s44
      %47 = dma.hbm_to_vmem [thread:$0]  %s2, 16, %s45, [#allocation7]
    $region13: #{tpu_custom_call.1} parent=1 // pred_fallthru
      _
    // Predicated region
    $region14: #{tpu_custom_call.1} parent=1 // pred_check
      _
    $region15: #{tpu_custom_call.1} parent=1 // pred_check_branch
      %49 = sbr.rel (0) target = $region17
    $region16: #{tpu_custom_call.1} parent=1 // pred_region
      %s51 = ssub.s32 16, 16
      %52 = vsyncadd [#allocation10], %s51
      %s54 = sshll.u32 [#allocation9], 4
      %s55 = int_to_ptr.vmem [resolvable:$true] %s54
      %57 = dma.hbm_to_vmem [thread:$0]  %s3, 16, %s55, [#allocation10]
    $region17: #{tpu_custom_call.1} parent=1 // pred_fallthru
      _
    // Predicated region
    $region18: #{tpu_custom_call.1} parent=1 // pred_check
      _
    $region19: #{tpu_custom_call.1} parent=1 // pred_check_branch
      %59 = sbr.rel (0) target = $region21
    $region20: #{tpu_custom_call.1} parent=1 // pred_region
      _
    $region21: #{tpu_custom_call.1} parent=1 // pred_fallthru
      _
    // Predicated region
    $region22: #{tpu_custom_call.1} parent=1 // pred_check
      _
    $region23: #{tpu_custom_call.1} parent=1 // pred_check_branch
      %61 = sbr.rel (0) target = $region25
    $region24: #{tpu_custom_call.1} parent=1 // pred_region
      %62 = dma.done [#allocation4], 512
    $region25: #{tpu_custom_call.1} parent=1 // pred_fallthru
      _
    // Predicated region
    $region26: #{tpu_custom_call.1} parent=1 // pred_check
      _
    $region27: #{tpu_custom_call.1} parent=1 // pred_check_branch
      %64 = sbr.rel (0) target = $region29
    $region28: #{tpu_custom_call.1} parent=1 // pred_region
      %65 = dma.done [#allocation7], 16384
    $region29: #{tpu_custom_call.1} parent=1 // pred_fallthru
      _
    // Predicated region
    $region30: #{tpu_custom_call.1} parent=1 // pred_check
      _
    $region31: #{tpu_custom_call.1} parent=1 // pred_check_branch
      %67 = sbr.rel (0) target = $region33
    $region32: #{tpu_custom_call.1} parent=1 // pred_region
      %68 = dma.done [#allocation7], 16
    $region33: #{tpu_custom_call.1} parent=1 // pred_fallthru
      _
    // Predicated region
    $region34: #{tpu_custom_call.1} parent=1 // pred_check
      _
    $region35: #{tpu_custom_call.1} parent=1 // pred_check_branch
      %70 = sbr.rel (0) target = $region37
    $region36: #{tpu_custom_call.1} parent=1 // pred_region
      %71 = dma.done [#allocation10], 16
    $region37: #{tpu_custom_call.1} parent=1 // pred_fallthru
      _
    %v73 = vld [vmem:[#allocation3] sm:$0xff]
    %v74 = vld [vmem:[#allocation3 + $0x8] sm:$0xff]
    %v75 = vld [vmem:[#allocation3 + $0x10] sm:$0xff]
    %v76 = vld [vmem:[#allocation3 + $0x18] sm:$0xff]
    %v81 = vcombine.high %v73, %v73
    %v83 = vunpack.c.l.s4 1983009808
    %v84 = vunpack.c.0.s8 %v83
    %v85 = vlaneseq
    %v86 = vshrl.u32 %v85, 7
    %v87 = vsub.s32 %v84, %v86
    %v88 = vrot.slane %v73, %v87
    %v90 = vunpack.c.l.s4 1983009808
    %v91 = vunpack.c.0.s8 %v90
    %v92 = vlaneseq
    %v93 = vshrl.u32 %v92, 7
    %v94 = vsub.s32 %v91, %v93
    %v95 = vrot.slane %v81, %v94
    %v96 = vcombine.high %v88, %v88
    %v97 = vcombine.high %v95, %v95
    %v98 = vcombine.high %v74, %v74
    %v100 = vunpack.c.l.s4 1983009808
    %v101 = vunpack.c.0.s8 %v100
    %v102 = vlaneseq
    %v103 = vshrl.u32 %v102, 7
    %v104 = vsub.s32 %v101, %v103
    %v105 = vrot.slane %v74, %v104
    %v107 = vunpack.c.l.s4 1983009808
    %v108 = vunpack.c.0.s8 %v107
    %v109 = vlaneseq
    %v110 = vshrl.u32 %v109, 7
    %v111 = vsub.s32 %v108, %v110
    %v112 = vrot.slane %v98, %v111
    %v113 = vcombine.high %v105, %v105
    %v114 = vcombine.high %v112, %v112
    %v115 = vcombine.high %v75, %v75
    %v117 = vunpack.c.l.s4 1983009808
    %v118 = vunpack.c.0.s8 %v117
    %v119 = vlaneseq
    %v120 = vshrl.u32 %v119, 7
    %v121 = vsub.s32 %v118, %v120
    %v122 = vrot.slane %v75, %v121
    %v124 = vunpack.c.l.s4 1983009808
    %v125 = vunpack.c.0.s8 %v124
    %v126 = vlaneseq
    %v127 = vshrl.u32 %v126, 7
    %v128 = vsub.s32 %v125, %v127
    %v129 = vrot.slane %v115, %v128
    %v130 = vcombine.high %v122, %v122
    %v131 = vcombine.high %v129, %v129
    %v132 = vcombine.high %v76, %v76
    %v134 = vunpack.c.l.s4 1983009808
    %v135 = vunpack.c.0.s8 %v134
    %v136 = vlaneseq
    %v137 = vshrl.u32 %v136, 7
    %v138 = vsub.s32 %v135, %v137
    %v139 = vrot.slane %v76, %v138
    %v141 = vunpack.c.l.s4 1983009808
    %v142 = vunpack.c.0.s8 %v141
    %v143 = vlaneseq
    %v144 = vshrl.u32 %v143, 7
    %v145 = vsub.s32 %v142, %v144
    %v146 = vrot.slane %v132, %v145
    %v147 = vcombine.high %v139, %v139
    %v148 = vcombine.high %v146, %v146
    %v165 = vpack.c.bf16 %v88, %v88
    %v166 = vpack.c.bf16 %v96, %v96
    %v167 = vpack.c.bf16 %v95, %v95
    %v168 = vpack.c.bf16 %v97, %v97
    %v169 = vpack.c.bf16 %v105, %v105
    %v170 = vpack.c.bf16 %v113, %v113
    %v171 = vpack.c.bf16 %v112, %v112
    %v172 = vpack.c.bf16 %v114, %v114
    %v173 = vpack.c.bf16 %v122, %v122
    %v174 = vpack.c.bf16 %v130, %v130
    %v175 = vpack.c.bf16 %v129, %v129
    %v176 = vpack.c.bf16 %v131, %v131
    %v177 = vpack.c.bf16 %v139, %v139
    %v178 = vpack.c.bf16 %v147, %v147
    %v179 = vpack.c.bf16 %v146, %v146
    %v180 = vpack.c.bf16 %v148, %v148
    %v181 = vld [vmem:[#allocation6] sm:$0xf]
    %v182 = vld [vmem:[#allocation6 + $0x4] sm:$0xf]
    %v183 = vld [vmem:[#allocation6 + $0x8] sm:$0xf]
    %v184 = vld [vmem:[#allocation6 + $0xc] sm:$0xf]
    %v185 = vld [vmem:[#allocation6 + $0x10] sm:$0xf]
    %v186 = vld [vmem:[#allocation6 + $0x14] sm:$0xf]
    %v187 = vld [vmem:[#allocation6 + $0x18] sm:$0xf]
    %v188 = vld [vmem:[#allocation6 + $0x1c] sm:$0xf]
    %v189 = vld [vmem:[#allocation6 + $0x20] sm:$0xf]
    %v190 = vld [vmem:[#allocation6 + $0x24] sm:$0xf]
    %v191 = vld [vmem:[#allocation6 + $0x28] sm:$0xf]
    %v192 = vld [vmem:[#allocation6 + $0x2c] sm:$0xf]
    %v193 = vld [vmem:[#allocation6 + $0x30] sm:$0xf]
    %v194 = vld [vmem:[#allocation6 + $0x34] sm:$0xf]
    %v195 = vld [vmem:[#allocation6 + $0x38] sm:$0xf]
    %v196 = vld [vmem:[#allocation6 + $0x3c] sm:$0xf]
    %v197 = vld [vmem:[#allocation6 + $0x40] sm:$0xf]
    %v198 = vld [vmem:[#allocation6 + $0x44] sm:$0xf]
    %v199 = vld [vmem:[#allocation6 + $0x48] sm:$0xf]
    %v200 = vld [vmem:[#allocation6 + $0x4c] sm:$0xf]
    %v201 = vld [vmem:[#allocation6 + $0x50] sm:$0xf]
    %v202 = vld [vmem:[#allocation6 + $0x54] sm:$0xf]
    %v203 = vld [vmem:[#allocation6 + $0x58] sm:$0xf]
    %v204 = vld [vmem:[#allocation6 + $0x5c] sm:$0xf]
    %v205 = vld [vmem:[#allocation6 + $0x60] sm:$0xf]
    %v206 = vld [vmem:[#allocation6 + $0x64] sm:$0xf]
    %v207 = vld [vmem:[#allocation6 + $0x68] sm:$0xf]
    %v208 = vld [vmem:[#allocation6 + $0x6c] sm:$0xf]
    %v209 = vld [vmem:[#allocation6 + $0x70] sm:$0xf]
    %v210 = vld [vmem:[#allocation6 + $0x74] sm:$0xf]
    %v211 = vld [vmem:[#allocation6 + $0x78] sm:$0xf]
    %v212 = vld [vmem:[#allocation6 + $0x7c] sm:$0xf]
    %v213 = vld [vmem:[#allocation6 + $0x80] sm:$0xf]
    %v214 = vld [vmem:[#allocation6 + $0x84] sm:$0xf]
    %v215 = vld [vmem:[#allocation6 + $0x88] sm:$0xf]
    %v216 = vld [vmem:[#allocation6 + $0x8c] sm:$0xf]
    %v217 = vld [vmem:[#allocation6 + $0x90] sm:$0xf]
    %v218 = vld [vmem:[#allocation6 + $0x94] sm:$0xf]
    %v219 = vld [vmem:[#allocation6 + $0x98] sm:$0xf]
    %v220 = vld [vmem:[#allocation6 + $0x9c] sm:$0xf]
    %v221 = vld [vmem:[#allocation6 + $0xa0] sm:$0xf]
    %v222 = vld [vmem:[#allocation6 + $0xa4] sm:$0xf]
    %v223 = vld [vmem:[#allocation6 + $0xa8] sm:$0xf]
    %v224 = vld [vmem:[#allocation6 + $0xac] sm:$0xf]
    %v225 = vld [vmem:[#allocation6 + $0xb0] sm:$0xf]
    %v226 = vld [vmem:[#allocation6 + $0xb4] sm:$0xf]
    %v227 = vld [vmem:[#allocation6 + $0xb8] sm:$0xf]
    %v228 = vld [vmem:[#allocation6 + $0xbc] sm:$0xf]
    %v229 = vld [vmem:[#allocation6 + $0xc0] sm:$0xf]
    %v230 = vld [vmem:[#allocation6 + $0xc4] sm:$0xf]
    %v231 = vld [vmem:[#allocation6 + $0xc8] sm:$0xf]
    %v232 = vld [vmem:[#allocation6 + $0xcc] sm:$0xf]
    %v233 = vld [vmem:[#allocation6 + $0xd0] sm:$0xf]
    %v234 = vld [vmem:[#allocation6 + $0xd4] sm:$0xf]
    %v235 = vld [vmem:[#allocation6 + $0xd8] sm:$0xf]
    %v236 = vld [vmem:[#allocation6 + $0xdc] sm:$0xf]
    %v237 = vld [vmem:[#allocation6 + $0xe0] sm:$0xf]
    %v238 = vld [vmem:[#allocation6 + $0xe4] sm:$0xf]
    %v239 = vld [vmem:[#allocation6 + $0xe8] sm:$0xf]
    %v240 = vld [vmem:[#allocation6 + $0xec] sm:$0xf]
    %v241 = vld [vmem:[#allocation6 + $0xf0] sm:$0xf]
    %v242 = vld [vmem:[#allocation6 + $0xf4] sm:$0xf]
    %v243 = vld [vmem:[#allocation6 + $0xf8] sm:$0xf]
    %v244 = vld [vmem:[#allocation6 + $0xfc] sm:$0xf]
    %v245 = vld [vmem:[#allocation6 + $0x100] sm:$0xf]
    %v246 = vld [vmem:[#allocation6 + $0x104] sm:$0xf]
    %v247 = vld [vmem:[#allocation6 + $0x108] sm:$0xf]
    %v248 = vld [vmem:[#allocation6 + $0x10c] sm:$0xf]
    %v249 = vld [vmem:[#allocation6 + $0x110] sm:$0xf]
    %v250 = vld [vmem:[#allocation6 + $0x114] sm:$0xf]
    %v251 = vld [vmem:[#allocation6 + $0x118] sm:$0xf]
    %v252 = vld [vmem:[#allocation6 + $0x11c] sm:$0xf]
    %v253 = vld [vmem:[#allocation6 + $0x120] sm:$0xf]
    %v254 = vld [vmem:[#allocation6 + $0x124] sm:$0xf]
    %v255 = vld [vmem:[#allocation6 + $0x128] sm:$0xf]
    %v256 = vld [vmem:[#allocation6 + $0x12c] sm:$0xf]
    %v257 = vld [vmem:[#allocation6 + $0x130] sm:$0xf]
    %v258 = vld [vmem:[#allocation6 + $0x134] sm:$0xf]
    %v259 = vld [vmem:[#allocation6 + $0x138] sm:$0xf]
    %v260 = vld [vmem:[#allocation6 + $0x13c] sm:$0xf]
    %v261 = vld [vmem:[#allocation6 + $0x140] sm:$0xf]
    %v262 = vld [vmem:[#allocation6 + $0x144] sm:$0xf]
    %v263 = vld [vmem:[#allocation6 + $0x148] sm:$0xf]
    %v264 = vld [vmem:[#allocation6 + $0x14c] sm:$0xf]
    %v265 = vld [vmem:[#allocation6 + $0x150] sm:$0xf]
    %v266 = vld [vmem:[#allocation6 + $0x154] sm:$0xf]
    %v267 = vld [vmem:[#allocation6 + $0x158] sm:$0xf]
    %v268 = vld [vmem:[#allocation6 + $0x15c] sm:$0xf]
    %v269 = vld [vmem:[#allocation6 + $0x160] sm:$0xf]
    %v270 = vld [vmem:[#allocation6 + $0x164] sm:$0xf]
    %v271 = vld [vmem:[#allocation6 + $0x168] sm:$0xf]
    %v272 = vld [vmem:[#allocation6 + $0x16c] sm:$0xf]
    %v273 = vld [vmem:[#allocation6 + $0x170] sm:$0xf]
    %v274 = vld [vmem:[#allocation6 + $0x174] sm:$0xf]
    %v275 = vld [vmem:[#allocation6 + $0x178] sm:$0xf]
    %v276 = vld [vmem:[#allocation6 + $0x17c] sm:$0xf]
    %v277 = vld [vmem:[#allocation6 + $0x180] sm:$0xf]
    %v278 = vld [vmem:[#allocation6 + $0x184] sm:$0xf]
    %v279 = vld [vmem:[#allocation6 + $0x188] sm:$0xf]
    %v280 = vld [vmem:[#allocation6 + $0x18c] sm:$0xf]
    %v281 = vld [vmem:[#allocation6 + $0x190] sm:$0xf]
    %v282 = vld [vmem:[#allocation6 + $0x194] sm:$0xf]
    %v283 = vld [vmem:[#allocation6 + $0x198] sm:$0xf]
    %v284 = vld [vmem:[#allocation6 + $0x19c] sm:$0xf]
    %v285 = vld [vmem:[#allocation6 + $0x1a0] sm:$0xf]
    %v286 = vld [vmem:[#allocation6 + $0x1a4] sm:$0xf]
    %v287 = vld [vmem:[#allocation6 + $0x1a8] sm:$0xf]
    %v288 = vld [vmem:[#allocation6 + $0x1ac] sm:$0xf]
    %v289 = vld [vmem:[#allocation6 + $0x1b0] sm:$0xf]
    %v290 = vld [vmem:[#allocation6 + $0x1b4] sm:$0xf]
    %v291 = vld [vmem:[#allocation6 + $0x1b8] sm:$0xf]
    %v292 = vld [vmem:[#allocation6 + $0x1bc] sm:$0xf]
    %v293 = vld [vmem:[#allocation6 + $0x1c0] sm:$0xf]
    %v294 = vld [vmem:[#allocation6 + $0x1c4] sm:$0xf]
    %v295 = vld [vmem:[#allocation6 + $0x1c8] sm:$0xf]
    %v296 = vld [vmem:[#allocation6 + $0x1cc] sm:$0xf]
    %v297 = vld [vmem:[#allocation6 + $0x1d0] sm:$0xf]
    %v298 = vld [vmem:[#allocation6 + $0x1d4] sm:$0xf]
    %v299 = vld [vmem:[#allocation6 + $0x1d8] sm:$0xf]
    %v300 = vld [vmem:[#allocation6 + $0x1dc] sm:$0xf]
    %v301 = vld [vmem:[#allocation6 + $0x1e0] sm:$0xf]
    %v302 = vld [vmem:[#allocation6 + $0x1e4] sm:$0xf]
    %v303 = vld [vmem:[#allocation6 + $0x1e8] sm:$0xf]
    %v304 = vld [vmem:[#allocation6 + $0x1ec] sm:$0xf]
    %v305 = vld [vmem:[#allocation6 + $0x1f0] sm:$0xf]
    %v306 = vld [vmem:[#allocation6 + $0x1f4] sm:$0xf]
    %v307 = vld [vmem:[#allocation6 + $0x1f8] sm:$0xf]
    %v308 = vld [vmem:[#allocation6 + $0x1fc] sm:$0xf]
    %v309 = vld [vmem:[#allocation6 + $0x200] sm:$0xf]
    %v310 = vld [vmem:[#allocation6 + $0x204] sm:$0xf]
    %v311 = vld [vmem:[#allocation6 + $0x208] sm:$0xf]
    %v312 = vld [vmem:[#allocation6 + $0x20c] sm:$0xf]
    %v313 = vld [vmem:[#allocation6 + $0x210] sm:$0xf]
    %v314 = vld [vmem:[#allocation6 + $0x214] sm:$0xf]
    %v315 = vld [vmem:[#allocation6 + $0x218] sm:$0xf]
    %v316 = vld [vmem:[#allocation6 + $0x21c] sm:$0xf]
    %v317 = vld [vmem:[#allocation6 + $0x220] sm:$0xf]
    %v318 = vld [vmem:[#allocation6 + $0x224] sm:$0xf]
    %v319 = vld [vmem:[#allocation6 + $0x228] sm:$0xf]
    %v320 = vld [vmem:[#allocation6 + $0x22c] sm:$0xf]
    %v321 = vld [vmem:[#allocation6 + $0x230] sm:$0xf]
    %v322 = vld [vmem:[#allocation6 + $0x234] sm:$0xf]
    %v323 = vld [vmem:[#allocation6 + $0x238] sm:$0xf]
    %v324 = vld [vmem:[#allocation6 + $0x23c] sm:$0xf]
    %v325 = vld [vmem:[#allocation6 + $0x240] sm:$0xf]
    %v326 = vld [vmem:[#allocation6 + $0x244] sm:$0xf]
    %v327 = vld [vmem:[#allocation6 + $0x248] sm:$0xf]
    %v328 = vld [vmem:[#allocation6 + $0x24c] sm:$0xf]
    %v329 = vld [vmem:[#allocation6 + $0x250] sm:$0xf]
    %v330 = vld [vmem:[#allocation6 + $0x254] sm:$0xf]
    %v331 = vld [vmem:[#allocation6 + $0x258] sm:$0xf]
    %v332 = vld [vmem:[#allocation6 + $0x25c] sm:$0xf]
    %v333 = vld [vmem:[#allocation6 + $0x260] sm:$0xf]
    %v334 = vld [vmem:[#allocation6 + $0x264] sm:$0xf]
    %v335 = vld [vmem:[#allocation6 + $0x268] sm:$0xf]
    %v336 = vld [vmem:[#allocation6 + $0x26c] sm:$0xf]
    %v337 = vld [vmem:[#allocation6 + $0x270] sm:$0xf]
    %v338 = vld [vmem:[#allocation6 + $0x274] sm:$0xf]
    %v339 = vld [vmem:[#allocation6 + $0x278] sm:$0xf]
    %v340 = vld [vmem:[#allocation6 + $0x27c] sm:$0xf]
    %v341 = vld [vmem:[#allocation6 + $0x280] sm:$0xf]
    %v342 = vld [vmem:[#allocation6 + $0x284] sm:$0xf]
    %v343 = vld [vmem:[#allocation6 + $0x288] sm:$0xf]
    %v344 = vld [vmem:[#allocation6 + $0x28c] sm:$0xf]
    %v345 = vld [vmem:[#allocation6 + $0x290] sm:$0xf]
    %v346 = vld [vmem:[#allocation6 + $0x294] sm:$0xf]
    %v347 = vld [vmem:[#allocation6 + $0x298] sm:$0xf]
    %v348 = vld [vmem:[#allocation6 + $0x29c] sm:$0xf]
    %v349 = vld [vmem:[#allocation6 + $0x2a0] sm:$0xf]
    %v350 = vld [vmem:[#allocation6 + $0x2a4] sm:$0xf]
    %v351 = vld [vmem:[#allocation6 + $0x2a8] sm:$0xf]
    %v352 = vld [vmem:[#allocation6 + $0x2ac] sm:$0xf]
    %v353 = vld [vmem:[#allocation6 + $0x2b0] sm:$0xf]
    %v354 = vld [vmem:[#allocation6 + $0x2b4] sm:$0xf]
    %v355 = vld [vmem:[#allocation6 + $0x2b8] sm:$0xf]
    %v356 = vld [vmem:[#allocation6 + $0x2bc] sm:$0xf]
    %v357 = vld [vmem:[#allocation6 + $0x2c0] sm:$0xf]
    %v358 = vld [vmem:[#allocation6 + $0x2c4] sm:$0xf]
    %v359 = vld [vmem:[#allocation6 + $0x2c8] sm:$0xf]
    %v360 = vld [vmem:[#allocation6 + $0x2cc] sm:$0xf]
    %v361 = vld [vmem:[#allocation6 + $0x2d0] sm:$0xf]
    %v362 = vld [vmem:[#allocation6 + $0x2d4] sm:$0xf]
    %v363 = vld [vmem:[#allocation6 + $0x2d8] sm:$0xf]
    %v364 = vld [vmem:[#allocation6 + $0x2dc] sm:$0xf]
    %v365 = vld [vmem:[#allocation6 + $0x2e0] sm:$0xf]
    %v366 = vld [vmem:[#allocation6 + $0x2e4] sm:$0xf]
    %v367 = vld [vmem:[#allocation6 + $0x2e8] sm:$0xf]
    %v368 = vld [vmem:[#allocation6 + $0x2ec] sm:$0xf]
    %v369 = vld [vmem:[#allocation6 + $0x2f0] sm:$0xf]
    %v370 = vld [vmem:[#allocation6 + $0x2f4] sm:$0xf]
    %v371 = vld [vmem:[#allocation6 + $0x2f8] sm:$0xf]
    %v372 = vld [vmem:[#allocation6 + $0x2fc] sm:$0xf]
    %v373 = vld [vmem:[#allocation6 + $0x300] sm:$0xf]
    %v374 = vld [vmem:[#allocation6 + $0x304] sm:$0xf]
    %v375 = vld [vmem:[#allocation6 + $0x308] sm:$0xf]
    %v376 = vld [vmem:[#allocation6 + $0x30c] sm:$0xf]
    %v377 = vld [vmem:[#allocation6 + $0x310] sm:$0xf]
    %v378 = vld [vmem:[#allocation6 + $0x314] sm:$0xf]
    %v379 = vld [vmem:[#allocation6 + $0x318] sm:$0xf]
    %v380 = vld [vmem:[#allocation6 + $0x31c] sm:$0xf]
    %v381 = vld [vmem:[#allocation6 + $0x320] sm:$0xf]
    %v382 = vld [vmem:[#allocation6 + $0x324] sm:$0xf]
    %v383 = vld [vmem:[#allocation6 + $0x328] sm:$0xf]
    %v384 = vld [vmem:[#allocation6 + $0x32c] sm:$0xf]
    %v385 = vld [vmem:[#allocation6 + $0x330] sm:$0xf]
    %v386 = vld [vmem:[#allocation6 + $0x334] sm:$0xf]
    %v387 = vld [vmem:[#allocation6 + $0x338] sm:$0xf]
    %v388 = vld [vmem:[#allocation6 + $0x33c] sm:$0xf]
    %v389 = vld [vmem:[#allocation6 + $0x340] sm:$0xf]
    %v390 = vld [vmem:[#allocation6 + $0x344] sm:$0xf]
    %v391 = vld [vmem:[#allocation6 + $0x348] sm:$0xf]
    %v392 = vld [vmem:[#allocation6 + $0x34c] sm:$0xf]
    %v393 = vld [vmem:[#allocation6 + $0x350] sm:$0xf]
    %v394 = vld [vmem:[#allocation6 + $0x354] sm:$0xf]
    %v395 = vld [vmem:[#allocation6 + $0x358] sm:$0xf]
    %v396 = vld [vmem:[#allocation6 + $0x35c] sm:$0xf]
    %v397 = vld [vmem:[#allocation6 + $0x360] sm:$0xf]
    %v398 = vld [vmem:[#allocation6 + $0x364] sm:$0xf]
    %v399 = vld [vmem:[#allocation6 + $0x368] sm:$0xf]
    %v400 = vld [vmem:[#allocation6 + $0x36c] sm:$0xf]
    %v401 = vld [vmem:[#allocation6 + $0x370] sm:$0xf]
    %v402 = vld [vmem:[#allocation6 + $0x374] sm:$0xf]
    %v403 = vld [vmem:[#allocation6 + $0x378] sm:$0xf]
    %v404 = vld [vmem:[#allocation6 + $0x37c] sm:$0xf]
    %v405 = vld [vmem:[#allocation6 + $0x380] sm:$0xf]
    %v406 = vld [vmem:[#allocation6 + $0x384] sm:$0xf]
    %v407 = vld [vmem:[#allocation6 + $0x388] sm:$0xf]
    %v408 = vld [vmem:[#allocation6 + $0x38c] sm:$0xf]
    %v409 = vld [vmem:[#allocation6 + $0x390] sm:$0xf]
    %v410 = vld [vmem:[#allocation6 + $0x394] sm:$0xf]
    %v411 = vld [vmem:[#allocation6 + $0x398] sm:$0xf]
    %v412 = vld [vmem:[#allocation6 + $0x39c] sm:$0xf]
    %v413 = vld [vmem:[#allocation6 + $0x3a0] sm:$0xf]
    %v414 = vld [vmem:[#allocation6 + $0x3a4] sm:$0xf]
    %v415 = vld [vmem:[#allocation6 + $0x3a8] sm:$0xf]
    %v416 = vld [vmem:[#allocation6 + $0x3ac] sm:$0xf]
    %v417 = vld [vmem:[#allocation6 + $0x3b0] sm:$0xf]
    %v418 = vld [vmem:[#allocation6 + $0x3b4] sm:$0xf]
    %v419 = vld [vmem:[#allocation6 + $0x3b8] sm:$0xf]
    %v420 = vld [vmem:[#allocation6 + $0x3bc] sm:$0xf]
    %v421 = vld [vmem:[#allocation6 + $0x3c0] sm:$0xf]
    %v422 = vld [vmem:[#allocation6 + $0x3c4] sm:$0xf]
    %v423 = vld [vmem:[#allocation6 + $0x3c8] sm:$0xf]
    %v424 = vld [vmem:[#allocation6 + $0x3cc] sm:$0xf]
    %v425 = vld [vmem:[#allocation6 + $0x3d0] sm:$0xf]
    %v426 = vld [vmem:[#allocation6 + $0x3d4] sm:$0xf]
    %v427 = vld [vmem:[#allocation6 + $0x3d8] sm:$0xf]
    %v428 = vld [vmem:[#allocation6 + $0x3dc] sm:$0xf]
    %v429 = vld [vmem:[#allocation6 + $0x3e0] sm:$0xf]
    %v430 = vld [vmem:[#allocation6 + $0x3e4] sm:$0xf]
    %v431 = vld [vmem:[#allocation6 + $0x3e8] sm:$0xf]
    %v432 = vld [vmem:[#allocation6 + $0x3ec] sm:$0xf]
    %v433 = vld [vmem:[#allocation6 + $0x3f0] sm:$0xf]
    %v434 = vld [vmem:[#allocation6 + $0x3f4] sm:$0xf]
    %v435 = vld [vmem:[#allocation6 + $0x3f8] sm:$0xf]
    %v436 = vld [vmem:[#allocation6 + $0x3fc] sm:$0xf]
    %v437 = vld [vmem:[#allocation8] sm:$0x1]
    %v439 = vlaneseq
    %v440 = vshrl.u32 %v439, 7
    %v441 = vsub.s32 0, %v440
    %v442 = vrot.slane %v437, %v441
    %v700 = vunpack.c.l.b16 %v181
    %v701 = vunpack.c.l.b16 %v182
    %v702 = vunpack.c.l.b16 %v183
    %v703 = vunpack.c.l.b16 %v184
    %v704 = vunpack.c.l.b16 %v185
    %v705 = vunpack.c.l.b16 %v186
    %v706 = vunpack.c.l.b16 %v187
    %v707 = vunpack.c.l.b16 %v188
    %v708 = vunpack.c.l.b16 %v189
    %v709 = vunpack.c.l.b16 %v190
    %v710 = vunpack.c.l.b16 %v191
    %v711 = vunpack.c.l.b16 %v192
    %v712 = vunpack.c.l.b16 %v193
    %v713 = vunpack.c.l.b16 %v194
    %v714 = vunpack.c.l.b16 %v195
    %v715 = vunpack.c.l.b16 %v196
    %v716 = vunpack.c.l.b16 %v197
    %v717 = vunpack.c.l.b16 %v198
    %v718 = vunpack.c.l.b16 %v199
    %v719 = vunpack.c.l.b16 %v200
    %v720 = vunpack.c.l.b16 %v201
    %v721 = vunpack.c.l.b16 %v202
    %v722 = vunpack.c.l.b16 %v203
    %v723 = vunpack.c.l.b16 %v204
    %v724 = vunpack.c.l.b16 %v205
    %v725 = vunpack.c.l.b16 %v206
    %v726 = vunpack.c.l.b16 %v207
    %v727 = vunpack.c.l.b16 %v208
    %v728 = vunpack.c.l.b16 %v209
    %v729 = vunpack.c.l.b16 %v210
    %v730 = vunpack.c.l.b16 %v211
    %v731 = vunpack.c.l.b16 %v212
    %v732 = vunpack.c.l.b16 %v213
    %v733 = vunpack.c.l.b16 %v214
    %v734 = vunpack.c.l.b16 %v215
    %v735 = vunpack.c.l.b16 %v216
    %v736 = vunpack.c.l.b16 %v217
    %v737 = vunpack.c.l.b16 %v218
    %v738 = vunpack.c.l.b16 %v219
    %v739 = vunpack.c.l.b16 %v220
    %v740 = vunpack.c.l.b16 %v221
    %v741 = vunpack.c.l.b16 %v222
    %v742 = vunpack.c.l.b16 %v223
    %v743 = vunpack.c.l.b16 %v224
    %v744 = vunpack.c.l.b16 %v225
    %v745 = vunpack.c.l.b16 %v226
    %v746 = vunpack.c.l.b16 %v227
    %v747 = vunpack.c.l.b16 %v228
    %v748 = vunpack.c.l.b16 %v229
    %v749 = vunpack.c.l.b16 %v230
    %v750 = vunpack.c.l.b16 %v231
    %v751 = vunpack.c.l.b16 %v232
    %v752 = vunpack.c.l.b16 %v233
    %v753 = vunpack.c.l.b16 %v234
    %v754 = vunpack.c.l.b16 %v235
    %v755 = vunpack.c.l.b16 %v236
    %v756 = vunpack.c.l.b16 %v237
    %v757 = vunpack.c.l.b16 %v238
    %v758 = vunpack.c.l.b16 %v239
    %v759 = vunpack.c.l.b16 %v240
    %v760 = vunpack.c.l.b16 %v241
    %v761 = vunpack.c.l.b16 %v242
    %v762 = vunpack.c.l.b16 %v243
    %v763 = vunpack.c.l.b16 %v244
    %v764 = vunpack.c.l.b16 %v245
    %v765 = vunpack.c.l.b16 %v246
    %v766 = vunpack.c.l.b16 %v247
    %v767 = vunpack.c.l.b16 %v248
    %v768 = vunpack.c.l.b16 %v249
    %v769 = vunpack.c.l.b16 %v250
    %v770 = vunpack.c.l.b16 %v251
    %v771 = vunpack.c.l.b16 %v252
    %v772 = vunpack.c.l.b16 %v253
    %v773 = vunpack.c.l.b16 %v254
    %v774 = vunpack.c.l.b16 %v255
    %v775 = vunpack.c.l.b16 %v256
    %v776 = vunpack.c.l.b16 %v257
    %v777 = vunpack.c.l.b16 %v258
    %v778 = vunpack.c.l.b16 %v259
    %v779 = vunpack.c.l.b16 %v260
    %v780 = vunpack.c.l.b16 %v261
    %v781 = vunpack.c.l.b16 %v262
    %v782 = vunpack.c.l.b16 %v263
    %v783 = vunpack.c.l.b16 %v264
    %v784 = vunpack.c.l.b16 %v265
    %v785 = vunpack.c.l.b16 %v266
    %v786 = vunpack.c.l.b16 %v267
    %v787 = vunpack.c.l.b16 %v268
    %v788 = vunpack.c.l.b16 %v269
    %v789 = vunpack.c.l.b16 %v270
    %v790 = vunpack.c.l.b16 %v271
    %v791 = vunpack.c.l.b16 %v272
    %v792 = vunpack.c.l.b16 %v273
    %v793 = vunpack.c.l.b16 %v274
    %v794 = vunpack.c.l.b16 %v275
    %v795 = vunpack.c.l.b16 %v276
    %v796 = vunpack.c.l.b16 %v277
    %v797 = vunpack.c.l.b16 %v278
    %v798 = vunpack.c.l.b16 %v279
    %v799 = vunpack.c.l.b16 %v280
    %v800 = vunpack.c.l.b16 %v281
    %v801 = vunpack.c.l.b16 %v282
    %v802 = vunpack.c.l.b16 %v283
    %v803 = vunpack.c.l.b16 %v284
    %v804 = vunpack.c.l.b16 %v285
    %v805 = vunpack.c.l.b16 %v286
    %v806 = vunpack.c.l.b16 %v287
    %v807 = vunpack.c.l.b16 %v288
    %v808 = vunpack.c.l.b16 %v289
    %v809 = vunpack.c.l.b16 %v290
    %v810 = vunpack.c.l.b16 %v291
    %v811 = vunpack.c.l.b16 %v292
    %v812 = vunpack.c.l.b16 %v293
    %v813 = vunpack.c.l.b16 %v294
    %v814 = vunpack.c.l.b16 %v295
    %v815 = vunpack.c.l.b16 %v296
    %v816 = vunpack.c.l.b16 %v297
    %v817 = vunpack.c.l.b16 %v298
    %v818 = vunpack.c.l.b16 %v299
    %v819 = vunpack.c.l.b16 %v300
    %v820 = vunpack.c.l.b16 %v301
    %v821 = vunpack.c.l.b16 %v302
    %v822 = vunpack.c.l.b16 %v303
    %v823 = vunpack.c.l.b16 %v304
    %v824 = vunpack.c.l.b16 %v305
    %v825 = vunpack.c.l.b16 %v306
    %v826 = vunpack.c.l.b16 %v307
    %v827 = vunpack.c.l.b16 %v308
    %v828 = vunpack.c.l.b16 %v309
    %v829 = vunpack.c.l.b16 %v310
    %v830 = vunpack.c.l.b16 %v311
    %v831 = vunpack.c.l.b16 %v312
    %v832 = vunpack.c.l.b16 %v313
    %v833 = vunpack.c.l.b16 %v314
    %v834 = vunpack.c.l.b16 %v315
    %v835 = vunpack.c.l.b16 %v316
    %v836 = vunpack.c.l.b16 %v317
    %v837 = vunpack.c.l.b16 %v318
    %v838 = vunpack.c.l.b16 %v319
    %v839 = vunpack.c.l.b16 %v320
    %v840 = vunpack.c.l.b16 %v321
    %v841 = vunpack.c.l.b16 %v322
    %v842 = vunpack.c.l.b16 %v323
    %v843 = vunpack.c.l.b16 %v324
    %v844 = vunpack.c.l.b16 %v325
    %v845 = vunpack.c.l.b16 %v326
    %v846 = vunpack.c.l.b16 %v327
    %v847 = vunpack.c.l.b16 %v328
    %v848 = vunpack.c.l.b16 %v329
    %v849 = vunpack.c.l.b16 %v330
    %v850 = vunpack.c.l.b16 %v331
    %v851 = vunpack.c.l.b16 %v332
    %v852 = vunpack.c.l.b16 %v333
    %v853 = vunpack.c.l.b16 %v334
    %v854 = vunpack.c.l.b16 %v335
    %v855 = vunpack.c.l.b16 %v336
    %v856 = vunpack.c.l.b16 %v337
    %v857 = vunpack.c.l.b16 %v338
    %v858 = vunpack.c.l.b16 %v339
    %v859 = vunpack.c.l.b16 %v340
    %v860 = vunpack.c.l.b16 %v341
    %v861 = vunpack.c.l.b16 %v342
    %v862 = vunpack.c.l.b16 %v343
    %v863 = vunpack.c.l.b16 %v344
    %v864 = vunpack.c.l.b16 %v345
    %v865 = vunpack.c.l.b16 %v346
    %v866 = vunpack.c.l.b16 %v347
    %v867 = vunpack.c.l.b16 %v348
    %v868 = vunpack.c.l.b16 %v349
    %v869 = vunpack.c.l.b16 %v350
    %v870 = vunpack.c.l.b16 %v351
    %v871 = vunpack.c.l.b16 %v352
    %v872 = vunpack.c.l.b16 %v353
    %v873 = vunpack.c.l.b16 %v354
    %v874 = vunpack.c.l.b16 %v355
    %v875 = vunpack.c.l.b16 %v356
    %v876 = vunpack.c.l.b16 %v357
    %v877 = vunpack.c.l.b16 %v358
    %v878 = vunpack.c.l.b16 %v359
    %v879 = vunpack.c.l.b16 %v360
    %v880 = vunpack.c.l.b16 %v361
    %v881 = vunpack.c.l.b16 %v362
    %v882 = vunpack.c.l.b16 %v363
    %v883 = vunpack.c.l.b16 %v364
    %v884 = vunpack.c.l.b16 %v365
    %v885 = vunpack.c.l.b16 %v366
    %v886 = vunpack.c.l.b16 %v367
    %v887 = vunpack.c.l.b16 %v368
    %v888 = vunpack.c.l.b16 %v369
    %v889 = vunpack.c.l.b16 %v370
    %v890 = vunpack.c.l.b16 %v371
    %v891 = vunpack.c.l.b16 %v372
    %v892 = vunpack.c.l.b16 %v373
    %v893 = vunpack.c.l.b16 %v374
    %v894 = vunpack.c.l.b16 %v375
    %v895 = vunpack.c.l.b16 %v376
    %v896 = vunpack.c.l.b16 %v377
    %v897 = vunpack.c.l.b16 %v378
    %v898 = vunpack.c.l.b16 %v379
    %v899 = vunpack.c.l.b16 %v380
    %v900 = vunpack.c.l.b16 %v381
    %v901 = vunpack.c.l.b16 %v382
    %v902 = vunpack.c.l.b16 %v383
    %v903 = vunpack.c.l.b16 %v384
    %v904 = vunpack.c.l.b16 %v385
    %v905 = vunpack.c.l.b16 %v386
    %v906 = vunpack.c.l.b16 %v387
    %v907 = vunpack.c.l.b16 %v388
    %v908 = vunpack.c.l.b16 %v389
    %v909 = vunpack.c.l.b16 %v390
    %v910 = vunpack.c.l.b16 %v391
    %v911 = vunpack.c.l.b16 %v392
    %v912 = vunpack.c.l.b16 %v393
    %v913 = vunpack.c.l.b16 %v394
    %v914 = vunpack.c.l.b16 %v395
    %v915 = vunpack.c.l.b16 %v396
    %v916 = vunpack.c.l.b16 %v397
    %v917 = vunpack.c.l.b16 %v398
    %v918 = vunpack.c.l.b16 %v399
    %v919 = vunpack.c.l.b16 %v400
    %v920 = vunpack.c.l.b16 %v401
    %v921 = vunpack.c.l.b16 %v402
    %v922 = vunpack.c.l.b16 %v403
    %v923 = vunpack.c.l.b16 %v404
    %v924 = vunpack.c.l.b16 %v405
    %v925 = vunpack.c.l.b16 %v406
    %v926 = vunpack.c.l.b16 %v407
    %v927 = vunpack.c.l.b16 %v408
    %v928 = vunpack.c.l.b16 %v409
    %v929 = vunpack.c.l.b16 %v410
    %v930 = vunpack.c.l.b16 %v411
    %v931 = vunpack.c.l.b16 %v412
    %v932 = vunpack.c.l.b16 %v413
    %v933 = vunpack.c.l.b16 %v414
    %v934 = vunpack.c.l.b16 %v415
    %v935 = vunpack.c.l.b16 %v416
    %v936 = vunpack.c.l.b16 %v417
    %v937 = vunpack.c.l.b16 %v418
    %v938 = vunpack.c.l.b16 %v419
    %v939 = vunpack.c.l.b16 %v420
    %v940 = vunpack.c.l.b16 %v421
    %v941 = vunpack.c.l.b16 %v422
    %v942 = vunpack.c.l.b16 %v423
    %v943 = vunpack.c.l.b16 %v424
    %v944 = vunpack.c.l.b16 %v425
    %v945 = vunpack.c.l.b16 %v426
    %v946 = vunpack.c.l.b16 %v427
    %v947 = vunpack.c.l.b16 %v428
    %v948 = vunpack.c.l.b16 %v429
    %v949 = vunpack.c.l.b16 %v430
    %v950 = vunpack.c.l.b16 %v431
    %v951 = vunpack.c.l.b16 %v432
    %v952 = vunpack.c.l.b16 %v433
    %v953 = vunpack.c.l.b16 %v434
    %v954 = vunpack.c.l.b16 %v435
    %v955 = vunpack.c.l.b16 %v436
    %v956 = vpack.c.b16 %v701, %v700
    %v957 = vpack.c.b16 %v703, %v702
    %v958 = vpack.c.b16 %v705, %v704
    %v959 = vpack.c.b16 %v707, %v706
    %v960 = vpack.c.b16 %v709, %v708
    %v961 = vpack.c.b16 %v711, %v710
    %v962 = vpack.c.b16 %v713, %v712
    %v963 = vpack.c.b16 %v715, %v714
    %v964 = vpack.c.b16 %v717, %v716
    %v965 = vpack.c.b16 %v719, %v718
    %v966 = vpack.c.b16 %v721, %v720
    %v967 = vpack.c.b16 %v723, %v722
    %v968 = vpack.c.b16 %v725, %v724
    %v969 = vpack.c.b16 %v727, %v726
    %v970 = vpack.c.b16 %v729, %v728
    %v971 = vpack.c.b16 %v731, %v730
    %v972 = vpack.c.b16 %v733, %v732
    %v973 = vpack.c.b16 %v735, %v734
    %v974 = vpack.c.b16 %v737, %v736
    %v975 = vpack.c.b16 %v739, %v738
    %v976 = vpack.c.b16 %v741, %v740
    %v977 = vpack.c.b16 %v743, %v742
    %v978 = vpack.c.b16 %v745, %v744
    %v979 = vpack.c.b16 %v747, %v746
    %v980 = vpack.c.b16 %v749, %v748
    %v981 = vpack.c.b16 %v751, %v750
    %v982 = vpack.c.b16 %v753, %v752
    %v983 = vpack.c.b16 %v755, %v754
    %v984 = vpack.c.b16 %v757, %v756
    %v985 = vpack.c.b16 %v759, %v758
    %v986 = vpack.c.b16 %v761, %v760
    %v987 = vpack.c.b16 %v763, %v762
    %v988 = vpack.c.b16 %v765, %v764
    %v989 = vpack.c.b16 %v767, %v766
    %v990 = vpack.c.b16 %v769, %v768
    %v991 = vpack.c.b16 %v771, %v770
    %v992 = vpack.c.b16 %v773, %v772
    %v993 = vpack.c.b16 %v775, %v774
    %v994 = vpack.c.b16 %v777, %v776
    %v995 = vpack.c.b16 %v779, %v778
    %v996 = vpack.c.b16 %v781, %v780
    %v997 = vpack.c.b16 %v783, %v782
    %v998 = vpack.c.b16 %v785, %v784
    %v999 = vpack.c.b16 %v787, %v786
    %v1000 = vpack.c.b16 %v789, %v788
    %v1001 = vpack.c.b16 %v791, %v790
    %v1002 = vpack.c.b16 %v793, %v792
    %v1003 = vpack.c.b16 %v795, %v794
    %v1004 = vpack.c.b16 %v797, %v796
    %v1005 = vpack.c.b16 %v799, %v798
    %v1006 = vpack.c.b16 %v801, %v800
    %v1007 = vpack.c.b16 %v803, %v802
    %v1008 = vpack.c.b16 %v805, %v804
    %v1009 = vpack.c.b16 %v807, %v806
    %v1010 = vpack.c.b16 %v809, %v808
    %v1011 = vpack.c.b16 %v811, %v810
    %v1012 = vpack.c.b16 %v813, %v812
    %v1013 = vpack.c.b16 %v815, %v814
    %v1014 = vpack.c.b16 %v817, %v816
    %v1015 = vpack.c.b16 %v819, %v818
    %v1016 = vpack.c.b16 %v821, %v820
    %v1017 = vpack.c.b16 %v823, %v822
    %v1018 = vpack.c.b16 %v825, %v824
    %v1019 = vpack.c.b16 %v827, %v826
    %v1020 = vpack.c.b16 %v829, %v828
    %v1021 = vpack.c.b16 %v831, %v830
    %v1022 = vpack.c.b16 %v833, %v832
    %v1023 = vpack.c.b16 %v835, %v834
    %v1024 = vpack.c.b16 %v837, %v836
    %v1025 = vpack.c.b16 %v839, %v838
    %v1026 = vpack.c.b16 %v841, %v840
    %v1027 = vpack.c.b16 %v843, %v842
    %v1028 = vpack.c.b16 %v845, %v844
    %v1029 = vpack.c.b16 %v847, %v846
    %v1030 = vpack.c.b16 %v849, %v848
    %v1031 = vpack.c.b16 %v851, %v850
    %v1032 = vpack.c.b16 %v853, %v852
    %v1033 = vpack.c.b16 %v855, %v854
    %v1034 = vpack.c.b16 %v857, %v856
    %v1035 = vpack.c.b16 %v859, %v858
    %v1036 = vpack.c.b16 %v861, %v860
    %v1037 = vpack.c.b16 %v863, %v862
    %v1038 = vpack.c.b16 %v865, %v864
    %v1039 = vpack.c.b16 %v867, %v866
    %v1040 = vpack.c.b16 %v869, %v868
    %v1041 = vpack.c.b16 %v871, %v870
    %v1042 = vpack.c.b16 %v873, %v872
    %v1043 = vpack.c.b16 %v875, %v874
    %v1044 = vpack.c.b16 %v877, %v876
    %v1045 = vpack.c.b16 %v879, %v878
    %v1046 = vpack.c.b16 %v881, %v880
    %v1047 = vpack.c.b16 %v883, %v882
    %v1048 = vpack.c.b16 %v885, %v884
    %v1049 = vpack.c.b16 %v887, %v886
    %v1050 = vpack.c.b16 %v889, %v888
    %v1051 = vpack.c.b16 %v891, %v890
    %v1052 = vpack.c.b16 %v893, %v892
    %v1053 = vpack.c.b16 %v895, %v894
    %v1054 = vpack.c.b16 %v897, %v896
    %v1055 = vpack.c.b16 %v899, %v898
    %v1056 = vpack.c.b16 %v901, %v900
    %v1057 = vpack.c.b16 %v903, %v902
    %v1058 = vpack.c.b16 %v905, %v904
    %v1059 = vpack.c.b16 %v907, %v906
    %v1060 = vpack.c.b16 %v909, %v908
    %v1061 = vpack.c.b16 %v911, %v910
    %v1062 = vpack.c.b16 %v913, %v912
    %v1063 = vpack.c.b16 %v915, %v914
    %v1064 = vpack.c.b16 %v917, %v916
    %v1065 = vpack.c.b16 %v919, %v918
    %v1066 = vpack.c.b16 %v921, %v920
    %v1067 = vpack.c.b16 %v923, %v922
    %v1068 = vpack.c.b16 %v925, %v924
    %v1069 = vpack.c.b16 %v927, %v926
    %v1070 = vpack.c.b16 %v929, %v928
    %v1071 = vpack.c.b16 %v931, %v930
    %v1072 = vpack.c.b16 %v933, %v932
    %v1073 = vpack.c.b16 %v935, %v934
    %v1074 = vpack.c.b16 %v937, %v936
    %v1075 = vpack.c.b16 %v939, %v938
    %v1076 = vpack.c.b16 %v941, %v940
    %v1077 = vpack.c.b16 %v943, %v942
    %v1078 = vpack.c.b16 %v945, %v944
    %v1079 = vpack.c.b16 %v947, %v946
    %v1080 = vpack.c.b16 %v949, %v948
    %v1081 = vpack.c.b16 %v951, %v950
    %v1082 = vpack.c.b16 %v953, %v952
    %v1083 = vpack.c.b16 %v955, %v954
    %1212 = vmatprep.subr.bf16.mxu0 0
    %1213 = vmatpush1.bf16.msra.mxu0 %v956
    %1214 = vmatprep.subr.bf16.mxu0 0
    %1215 = vmatpush1.bf16.msra.mxu0 %v957
    %1216 = vmatprep.subr.bf16.mxu0 0
    %1217 = vmatpush1.bf16.msra.mxu0 %v958
    %1218 = vmatprep.subr.bf16.mxu0 0
    %1219 = vmatpush1.bf16.msra.mxu0 %v959
    %1220 = vmatprep.subr.bf16.mxu0 0
    %1221 = vmatpush1.bf16.msra.mxu0 %v960
    %1222 = vmatprep.subr.bf16.mxu0 0
    %1223 = vmatpush1.bf16.msra.mxu0 %v961
    %1224 = vmatprep.subr.bf16.mxu0 0
    %1225 = vmatpush1.bf16.msra.mxu0 %v962
    %1226 = vmatprep.subr.bf16.mxu0 0
    %1227 = vmatpush1.bf16.msra.mxu0 %v963
    %1228 = vmatprep.subr.bf16.mxu0 0
    %1229 = vmatpush1.bf16.msra.mxu0 %v964
    %1230 = vmatprep.subr.bf16.mxu0 0
    %1231 = vmatpush1.bf16.msra.mxu0 %v965
    %1232 = vmatprep.subr.bf16.mxu0 0
    %1233 = vmatpush1.bf16.msra.mxu0 %v966
    %1234 = vmatprep.subr.bf16.mxu0 0
    %1235 = vmatpush1.bf16.msra.mxu0 %v967
    %1236 = vmatprep.subr.bf16.mxu0 0
    %1237 = vmatpush1.bf16.msra.mxu0 %v968
    %1238 = vmatprep.subr.bf16.mxu0 0
    %1239 = vmatpush1.bf16.msra.mxu0 %v969
    %1240 = vmatprep.subr.bf16.mxu0 0
    %1241 = vmatpush1.bf16.msra.mxu0 %v970
    %1242 = vmatprep.subr.bf16.mxu0 0
    %1243 = vmatpush1.bf16.msra.mxu0 %v971
    %1244 = vmatprep.mubr.bf16.mxu0 %v166
    %1245 = vmatmul.mubr.bf16.gmra.mrb[0].mxu0 %v165
    %v1246 = vpop.f32.mrb[0].mxu0
    %v1247 = vadd.f32 %v442, %v1246
    %v1248 = vpop.f32.mrb[0].mxu0
    %v1249 = vpop.f32.mrb[0].mxu0
    %v1250 = vpop.f32.mrb[0].mxu0
    %1251 = vdwg.mxu0
    %1252 = vmatprep.subr.bf16.mxu0 0
    %1253 = vmatpush1.bf16.msra.mxu0 %v972
    %1254 = vmatprep.subr.bf16.mxu0 0
    %1255 = vmatpush1.bf16.msra.mxu0 %v973
    %1256 = vmatprep.subr.bf16.mxu0 0
    %1257 = vmatpush1.bf16.msra.mxu0 %v974
    %1258 = vmatprep.subr.bf16.mxu0 0
    %1259 = vmatpush1.bf16.msra.mxu0 %v975
    %1260 = vmatprep.subr.bf16.mxu0 0
    %1261 = vmatpush1.bf16.msra.mxu0 %v976
    %1262 = vmatprep.subr.bf16.mxu0 0
    %1263 = vmatpush1.bf16.msra.mxu0 %v977
    %1264 = vmatprep.subr.bf16.mxu0 0
    %1265 = vmatpush1.bf16.msra.mxu0 %v978
    %1266 = vmatprep.subr.bf16.mxu0 0
    %1267 = vmatpush1.bf16.msra.mxu0 %v979
    %1268 = vmatprep.subr.bf16.mxu0 0
    %1269 = vmatpush1.bf16.msra.mxu0 %v980
    %1270 = vmatprep.subr.bf16.mxu0 0
    %1271 = vmatpush1.bf16.msra.mxu0 %v981
    %1272 = vmatprep.subr.bf16.mxu0 0
    %1273 = vmatpush1.bf16.msra.mxu0 %v982
    %1274 = vmatprep.subr.bf16.mxu0 0
    %1275 = vmatpush1.bf16.msra.mxu0 %v983
    %1276 = vmatprep.subr.bf16.mxu0 0
    %1277 = vmatpush1.bf16.msra.mxu0 %v984
    %1278 = vmatprep.subr.bf16.mxu0 0
    %1279 = vmatpush1.bf16.msra.mxu0 %v985
    %1280 = vmatprep.subr.bf16.mxu0 0
    %1281 = vmatpush1.bf16.msra.mxu0 %v986
    %1282 = vmatprep.subr.bf16.mxu0 0
    %1283 = vmatpush1.bf16.msra.mxu0 %v987
    %1284 = vmatprep.mubr.bf16.mxu0 %v168
    %1285 = vmatmul.mubr.bf16.gmra.mrb[0].mxu0 %v167
    %v1286 = vpop.f32.mrb[0].mxu0
    %v1287 = vadd.f32 %v1247, %v1286
    %v1288 = vpop.f32.mrb[0].mxu0
    %v1289 = vpop.f32.mrb[0].mxu0
    %v1290 = vpop.f32.mrb[0].mxu0
    %1291 = vdwg.mxu0
    %1292 = vmatprep.subr.bf16.mxu0 0
    %1293 = vmatpush1.bf16.msra.mxu0 %v988
    %1294 = vmatprep.subr.bf16.mxu0 0
    %1295 = vmatpush1.bf16.msra.mxu0 %v989
    %1296 = vmatprep.subr.bf16.mxu0 0
    %1297 = vmatpush1.bf16.msra.mxu0 %v990
    %1298 = vmatprep.subr.bf16.mxu0 0
    %1299 = vmatpush1.bf16.msra.mxu0 %v991
    %1300 = vmatprep.subr.bf16.mxu0 0
    %1301 = vmatpush1.bf16.msra.mxu0 %v992
    %1302 = vmatprep.subr.bf16.mxu0 0
    %1303 = vmatpush1.bf16.msra.mxu0 %v993
    %1304 = vmatprep.subr.bf16.mxu0 0
    %1305 = vmatpush1.bf16.msra.mxu0 %v994
    %1306 = vmatprep.subr.bf16.mxu0 0
    %1307 = vmatpush1.bf16.msra.mxu0 %v995
    %1308 = vmatprep.subr.bf16.mxu0 0
    %1309 = vmatpush1.bf16.msra.mxu0 %v996
    %1310 = vmatprep.subr.bf16.mxu0 0
    %1311 = vmatpush1.bf16.msra.mxu0 %v997
    %1312 = vmatprep.subr.bf16.mxu0 0
    %1313 = vmatpush1.bf16.msra.mxu0 %v998
    %1314 = vmatprep.subr.bf16.mxu0 0
    %1315 = vmatpush1.bf16.msra.mxu0 %v999
    %1316 = vmatprep.subr.bf16.mxu0 0
    %1317 = vmatpush1.bf16.msra.mxu0 %v1000
    %1318 = vmatprep.subr.bf16.mxu0 0
    %1319 = vmatpush1.bf16.msra.mxu0 %v1001
    %1320 = vmatprep.subr.bf16.mxu0 0
    %1321 = vmatpush1.bf16.msra.mxu0 %v1002
    %1322 = vmatprep.subr.bf16.mxu0 0
    %1323 = vmatpush1.bf16.msra.mxu0 %v1003
    %1324 = vmatprep.mubr.bf16.mxu0 %v170
    %1325 = vmatmul.mubr.bf16.gmra.mrb[0].mxu0 %v169
    %v1326 = vpop.f32.mrb[0].mxu0
    %v1327 = vadd.f32 %v1287, %v1326
    %v1328 = vpop.f32.mrb[0].mxu0
    %v1329 = vpop.f32.mrb[0].mxu0
    %v1330 = vpop.f32.mrb[0].mxu0
    %1331 = vdwg.mxu0
    %1332 = vmatprep.subr.bf16.mxu0 0
    %1333 = vmatpush1.bf16.msra.mxu0 %v1004
    %1334 = vmatprep.subr.bf16.mxu0 0
    %1335 = vmatpush1.bf16.msra.mxu0 %v1005
    %1336 = vmatprep.subr.bf16.mxu0 0
    %1337 = vmatpush1.bf16.msra.mxu0 %v1006
    %1338 = vmatprep.subr.bf16.mxu0 0
    %1339 = vmatpush1.bf16.msra.mxu0 %v1007
    %1340 = vmatprep.subr.bf16.mxu0 0
    %1341 = vmatpush1.bf16.msra.mxu0 %v1008
    %1342 = vmatprep.subr.bf16.mxu0 0
    %1343 = vmatpush1.bf16.msra.mxu0 %v1009
    %1344 = vmatprep.subr.bf16.mxu0 0
    %1345 = vmatpush1.bf16.msra.mxu0 %v1010
    %1346 = vmatprep.subr.bf16.mxu0 0
    %1347 = vmatpush1.bf16.msra.mxu0 %v1011
    %1348 = vmatprep.subr.bf16.mxu0 0
    %1349 = vmatpush1.bf16.msra.mxu0 %v1012
    %1350 = vmatprep.subr.bf16.mxu0 0
    %1351 = vmatpush1.bf16.msra.mxu0 %v1013
    %1352 = vmatprep.subr.bf16.mxu0 0
    %1353 = vmatpush1.bf16.msra.mxu0 %v1014
    %1354 = vmatprep.subr.bf16.mxu0 0
    %1355 = vmatpush1.bf16.msra.mxu0 %v1015
    %1356 = vmatprep.subr.bf16.mxu0 0
    %1357 = vmatpush1.bf16.msra.mxu0 %v1016
    %1358 = vmatprep.subr.bf16.mxu0 0
    %1359 = vmatpush1.bf16.msra.mxu0 %v1017
    %1360 = vmatprep.subr.bf16.mxu0 0
    %1361 = vmatpush1.bf16.msra.mxu0 %v1018
    %1362 = vmatprep.subr.bf16.mxu0 0
    %1363 = vmatpush1.bf16.msra.mxu0 %v1019
    %1364 = vmatprep.mubr.bf16.mxu0 %v172
    %1365 = vmatmul.mubr.bf16.gmra.mrb[0].mxu0 %v171
    %v1366 = vpop.f32.mrb[0].mxu0
    %v1367 = vadd.f32 %v1327, %v1366
    %v1368 = vpop.f32.mrb[0].mxu0
    %v1369 = vpop.f32.mrb[0].mxu0
    %v1370 = vpop.f32.mrb[0].mxu0
    %1371 = vdwg.mxu0
    %1372 = vmatprep.subr.bf16.mxu0 0
    %1373 = vmatpush1.bf16.msra.mxu0 %v1020
    %1374 = vmatprep.subr.bf16.mxu0 0
    %1375 = vmatpush1.bf16.msra.mxu0 %v1021
    %1376 = vmatprep.subr.bf16.mxu0 0
    %1377 = vmatpush1.bf16.msra.mxu0 %v1022
    %1378 = vmatprep.subr.bf16.mxu0 0
    %1379 = vmatpush1.bf16.msra.mxu0 %v1023
    %1380 = vmatprep.subr.bf16.mxu0 0
    %1381 = vmatpush1.bf16.msra.mxu0 %v1024
    %1382 = vmatprep.subr.bf16.mxu0 0
    %1383 = vmatpush1.bf16.msra.mxu0 %v1025
    %1384 = vmatprep.subr.bf16.mxu0 0
    %1385 = vmatpush1.bf16.msra.mxu0 %v1026
    %1386 = vmatprep.subr.bf16.mxu0 0
    %1387 = vmatpush1.bf16.msra.mxu0 %v1027
    %1388 = vmatprep.subr.bf16.mxu0 0
    %1389 = vmatpush1.bf16.msra.mxu0 %v1028
    %1390 = vmatprep.subr.bf16.mxu0 0
    %1391 = vmatpush1.bf16.msra.mxu0 %v1029
    %1392 = vmatprep.subr.bf16.mxu0 0
    %1393 = vmatpush1.bf16.msra.mxu0 %v1030
    %1394 = vmatprep.subr.bf16.mxu0 0
    %1395 = vmatpush1.bf16.msra.mxu0 %v1031
    %1396 = vmatprep.subr.bf16.mxu0 0
    %1397 = vmatpush1.bf16.msra.mxu0 %v1032
    %1398 = vmatprep.subr.bf16.mxu0 0
    %1399 = vmatpush1.bf16.msra.mxu0 %v1033
    %1400 = vmatprep.subr.bf16.mxu0 0
    %1401 = vmatpush1.bf16.msra.mxu0 %v1034
    %1402 = vmatprep.subr.bf16.mxu0 0
    %1403 = vmatpush1.bf16.msra.mxu0 %v1035
    %1404 = vmatprep.mubr.bf16.mxu0 %v174
    %1405 = vmatmul.mubr.bf16.gmra.mrb[0].mxu0 %v173
    %v1406 = vpop.f32.mrb[0].mxu0
    %v1407 = vadd.f32 %v1367, %v1406
    %v1408 = vpop.f32.mrb[0].mxu0
    %v1409 = vpop.f32.mrb[0].mxu0
    %v1410 = vpop.f32.mrb[0].mxu0
    %1411 = vdwg.mxu0
    %1412 = vmatprep.subr.bf16.mxu0 0
    %1413 = vmatpush1.bf16.msra.mxu0 %v1036
    %1414 = vmatprep.subr.bf16.mxu0 0
    %1415 = vmatpush1.bf16.msra.mxu0 %v1037
    %1416 = vmatprep.subr.bf16.mxu0 0
    %1417 = vmatpush1.bf16.msra.mxu0 %v1038
    %1418 = vmatprep.subr.bf16.mxu0 0
    %1419 = vmatpush1.bf16.msra.mxu0 %v1039
    %1420 = vmatprep.subr.bf16.mxu0 0
    %1421 = vmatpush1.bf16.msra.mxu0 %v1040
    %1422 = vmatprep.subr.bf16.mxu0 0
    %1423 = vmatpush1.bf16.msra.mxu0 %v1041
    %1424 = vmatprep.subr.bf16.mxu0 0
    %1425 = vmatpush1.bf16.msra.mxu0 %v1042
    %1426 = vmatprep.subr.bf16.mxu0 0
    %1427 = vmatpush1.bf16.msra.mxu0 %v1043
    %1428 = vmatprep.subr.bf16.mxu0 0
    %1429 = vmatpush1.bf16.msra.mxu0 %v1044
    %1430 = vmatprep.subr.bf16.mxu0 0
    %1431 = vmatpush1.bf16.msra.mxu0 %v1045
    %1432 = vmatprep.subr.bf16.mxu0 0
    %1433 = vmatpush1.bf16.msra.mxu0 %v1046
    %1434 = vmatprep.subr.bf16.mxu0 0
    %1435 = vmatpush1.bf16.msra.mxu0 %v1047
    %1436 = vmatprep.subr.bf16.mxu0 0
    %1437 = vmatpush1.bf16.msra.mxu0 %v1048
    %1438 = vmatprep.subr.bf16.mxu0 0
    %1439 = vmatpush1.bf16.msra.mxu0 %v1049
    %1440 = vmatprep.subr.bf16.mxu0 0
    %1441 = vmatpush1.bf16.msra.mxu0 %v1050
    %1442 = vmatprep.subr.bf16.mxu0 0
    %1443 = vmatpush1.bf16.msra.mxu0 %v1051
    %1444 = vmatprep.mubr.bf16.mxu0 %v176
    %1445 = vmatmul.mubr.bf16.gmra.mrb[0].mxu0 %v175
    %v1446 = vpop.f32.mrb[0].mxu0
    %v1447 = vadd.f32 %v1407, %v1446
    %v1448 = vpop.f32.mrb[0].mxu0
    %v1449 = vpop.f32.mrb[0].mxu0
    %v1450 = vpop.f32.mrb[0].mxu0
    %1451 = vdwg.mxu0
    %1452 = vmatprep.subr.bf16.mxu0 0
    %1453 = vmatpush1.bf16.msra.mxu0 %v1052
    %1454 = vmatprep.subr.bf16.mxu0 0
    %1455 = vmatpush1.bf16.msra.mxu0 %v1053
    %1456 = vmatprep.subr.bf16.mxu0 0
    %1457 = vmatpush1.bf16.msra.mxu0 %v1054
    %1458 = vmatprep.subr.bf16.mxu0 0
    %1459 = vmatpush1.bf16.msra.mxu0 %v1055
    %1460 = vmatprep.subr.bf16.mxu0 0
    %1461 = vmatpush1.bf16.msra.mxu0 %v1056
    %1462 = vmatprep.subr.bf16.mxu0 0
    %1463 = vmatpush1.bf16.msra.mxu0 %v1057
    %1464 = vmatprep.subr.bf16.mxu0 0
    %1465 = vmatpush1.bf16.msra.mxu0 %v1058
    %1466 = vmatprep.subr.bf16.mxu0 0
    %1467 = vmatpush1.bf16.msra.mxu0 %v1059
    %1468 = vmatprep.subr.bf16.mxu0 0
    %1469 = vmatpush1.bf16.msra.mxu0 %v1060
    %1470 = vmatprep.subr.bf16.mxu0 0
    %1471 = vmatpush1.bf16.msra.mxu0 %v1061
    %1472 = vmatprep.subr.bf16.mxu0 0
    %1473 = vmatpush1.bf16.msra.mxu0 %v1062
    %1474 = vmatprep.subr.bf16.mxu0 0
    %1475 = vmatpush1.bf16.msra.mxu0 %v1063
    %1476 = vmatprep.subr.bf16.mxu0 0
    %1477 = vmatpush1.bf16.msra.mxu0 %v1064
    %1478 = vmatprep.subr.bf16.mxu0 0
    %1479 = vmatpush1.bf16.msra.mxu0 %v1065
    %1480 = vmatprep.subr.bf16.mxu0 0
    %1481 = vmatpush1.bf16.msra.mxu0 %v1066
    %1482 = vmatprep.subr.bf16.mxu0 0
    %1483 = vmatpush1.bf16.msra.mxu0 %v1067
    %1484 = vmatprep.mubr.bf16.mxu0 %v178
    %1485 = vmatmul.mubr.bf16.gmra.mrb[0].mxu0 %v177
    %v1486 = vpop.f32.mrb[0].mxu0
    %v1487 = vadd.f32 %v1447, %v1486
    %v1488 = vpop.f32.mrb[0].mxu0
    %v1489 = vpop.f32.mrb[0].mxu0
    %v1490 = vpop.f32.mrb[0].mxu0
    %1491 = vdwg.mxu0
    %1492 = vmatprep.subr.bf16.mxu0 0
    %1493 = vmatpush1.bf16.msra.mxu0 %v1068
    %1494 = vmatprep.subr.bf16.mxu0 0
    %1495 = vmatpush1.bf16.msra.mxu0 %v1069
    %1496 = vmatprep.subr.bf16.mxu0 0
    %1497 = vmatpush1.bf16.msra.mxu0 %v1070
    %1498 = vmatprep.subr.bf16.mxu0 0
    %1499 = vmatpush1.bf16.msra.mxu0 %v1071
    %1500 = vmatprep.subr.bf16.mxu0 0
    %1501 = vmatpush1.bf16.msra.mxu0 %v1072
    %1502 = vmatprep.subr.bf16.mxu0 0
    %1503 = vmatpush1.bf16.msra.mxu0 %v1073
    %1504 = vmatprep.subr.bf16.mxu0 0
    %1505 = vmatpush1.bf16.msra.mxu0 %v1074
    %1506 = vmatprep.subr.bf16.mxu0 0
    %1507 = vmatpush1.bf16.msra.mxu0 %v1075
    %1508 = vmatprep.subr.bf16.mxu0 0
    %1509 = vmatpush1.bf16.msra.mxu0 %v1076
    %1510 = vmatprep.subr.bf16.mxu0 0
    %1511 = vmatpush1.bf16.msra.mxu0 %v1077
    %1512 = vmatprep.subr.bf16.mxu0 0
    %1513 = vmatpush1.bf16.msra.mxu0 %v1078
    %1514 = vmatprep.subr.bf16.mxu0 0
    %1515 = vmatpush1.bf16.msra.mxu0 %v1079
    %1516 = vmatprep.subr.bf16.mxu0 0
    %1517 = vmatpush1.bf16.msra.mxu0 %v1080
    %1518 = vmatprep.subr.bf16.mxu0 0
    %1519 = vmatpush1.bf16.msra.mxu0 %v1081
    %1520 = vmatprep.subr.bf16.mxu0 0
    %1521 = vmatpush1.bf16.msra.mxu0 %v1082
    %1522 = vmatprep.subr.bf16.mxu0 0
    %1523 = vmatpush1.bf16.msra.mxu0 %v1083
    %1524 = vmatprep.mubr.bf16.mxu0 %v180
    %1525 = vmatmul.mubr.bf16.gmra.mrb[0].mxu0 %v179
    %v1526 = vpop.f32.mrb[0].mxu0
    %v1527 = vadd.f32 %v1487, %v1526
    %v1528 = vpop.f32.mrb[0].mxu0
    %v1529 = vpop.f32.mrb[0].mxu0
    %v1530 = vpop.f32.mrb[0].mxu0
    %1531 = vdwg.mxu0
    %v1532 = vmax.f32 %v1527, 0.0
    %v1533 = vld [vmem:[#allocation9] sm:$0x1]
    %v1535 = vlaneseq
    %v1536 = vshrl.u32 %v1535, 7
    %v1537 = vsub.s32 0, %v1536
    %v1538 = vrot.slane %v1533, %v1537
    %v1540 = vmul.f32 %v1532, %v1538
    %vm1541 = vcmask 1041408
    %v1542 = vsel %vm1541, %v1540, 0.0
    %1543 = vadd.xlane.f32.xlu0 %v1542
    %v1544 = vpop.xlane.xlu0 %1543
    %v1545 = vld [vmem:[#allocation2] sm:$0x1]
    %v1547 = vlaneseq
    %v1548 = vshrl.u32 %v1547, 7
    %v1549 = vsub.s32 0, %v1548
    %v1550 = vrot.slane %v1545, %v1549
    %v1552 = vadd.f32 %v1544, %v1550
    %vm1553 = vcmask 1024
    %1554 = vst.msk [vmem:[#allocation11] sm:$0x3] %vm1553, %v1552
    // Predicated region
    $region38: #{tpu_custom_call.1} parent=1 // pred_check
      _
    $region39: #{tpu_custom_call.1} parent=1 // pred_check_branch
      %1556 = sbr.rel (0) target = $region41
    $region40: #{tpu_custom_call.1} parent=1 // pred_region
      %s1558 = ssub.s32 32, 32
      %1559 = vsyncadd [#allocation5], %s1558
      %s1561 = sshll.u32 [#allocation11], 4
      %s1562 = int_to_ptr.vmem [resolvable:$true] %s1561
      %1564 = dma.vmem_to_hbm [thread:$0]  %s1562, 32, %s5, [#allocation5]
    $region41: #{tpu_custom_call.1} parent=1 // pred_fallthru
      _
    // Predicated region
    $region42: #{tpu_custom_call.1} parent=1 // pred_check
      _
    $region43: #{tpu_custom_call.1} parent=1 // pred_check_branch
      %1566 = sbr.rel (0) target = $region45
    $region44: #{tpu_custom_call.1} parent=1 // pred_region
      %1567 = dma.done [#allocation5], 32
    $region45: #{tpu_custom_call.1} parent=1 // pred_fallthru
      _
    %1568 = vsyncpa [#allocation4], 1
    %1569 = vsyncpa [#allocation7], 1
    %1570 = vsyncpa [#allocation10], 1
    %1571 = vsyncpa [#allocation5], 1

</llo_original>
